<compile_context>
chip_gen: v5e
topology: v5e:2x2
jax: 0.10.0
libtpu: 0.0.40
codegen_flags: <defaults>
</compile_context>

<pallas_src>
import functools

import jax
import jax.numpy as jnp
from jax.experimental import pallas as pl
from jax.experimental.pallas import tpu as pltpu

IN_F, H1, H2, OUT_F = 104, 64, 32, 17


def mlp_kernel(x_ref, w1_ref, b1_ref, w2_ref, b2_ref, w3_ref, b3_ref, o_ref):
    """Fused 3-layer MLP forward: two ReLU linears + sigmoid head.

    x_ref:  (block_b, IN_F)  f32   (cast to bf16 in-kernel for the MXU)
    w*_ref: f32 weights, b*_ref: f32 biases (VMEM-resident across the grid)
    o_ref:  (block_b, OUT_F) f32
    """
    x = x_ref[...].astype(jnp.bfloat16)

    h = jnp.dot(x, w1_ref[...].astype(jnp.bfloat16),
                preferred_element_type=jnp.float32) + b1_ref[...]
    h = jnp.maximum(h, 0.0).astype(jnp.bfloat16)   # ReLU in f32, MXU feed bf16

    h = jnp.dot(h, w2_ref[...].astype(jnp.bfloat16),
                preferred_element_type=jnp.float32) + b2_ref[...]
    h = jnp.maximum(h, 0.0).astype(jnp.bfloat16)

    z = jnp.dot(h, w3_ref[...].astype(jnp.bfloat16),
                preferred_element_type=jnp.float32) + b3_ref[...]
    o_ref[...] = jax.nn.sigmoid(z).astype(o_ref.dtype)   # sigmoid in f32


def _round_up(n, m):
    return ((n + m - 1) // m) * m


def _num_tensorcores():
    """2 on v7x (two TCs/chip), 1 on v5e/v6e. Best-effort; defaults to 1."""
    try:
        kind = jax.devices()[0].device_kind.lower()
    except Exception:
        return 1
    return 2 if ("v7" in kind or "7x" in kind) else 1


def choose_block_b(batch, num_cores=1):
    """Pick the batch tile:
      * big (cap 8192 rows) to amortize per-grid-step overhead; at the cap the
        double-buffered f32 x + out tiles are ~16 MiB, which fits the explicit
        32 MiB vmem_limit_bytes on every generation,
      * on 2-TC chips (v7x) keep >= 4 grid steps when the batch allows so both
        TensorCores get work on the "parallel" axis and still pipeline,
      * on 1-TC chips (v5e/v6e) never split just to make extra steps.
    """
    bb = _round_up(min(batch, 8192), 8)
    if num_cores > 1 and batch >= 16:
        target_steps = 2 * num_cores
        if pl.cdiv(batch, bb) < target_steps:
            bb = _round_up(pl.cdiv(batch, target_steps), 8)
    return max(bb, 8)


@functools.partial(jax.jit, static_argnames=("block_b",))
def net_forward(x, w1, b1, w2, b2, w3, b3, *, block_b):
    B = x.shape[0]
    grid = (pl.cdiv(B, block_b),)

    def full_spec(shape):
        # Whole-array block, constant block index -> stays VMEM-resident
        # across the grid (no per-step re-DMA). (pipeline_mode=pl.Buffered(1)
        # would also drop the useless second buffer, but the saving is <64 KB.)
        return pl.BlockSpec(shape, lambda i: (0, 0))

    return pl.pallas_call(
        mlp_kernel,
        out_shape=jax.ShapeDtypeStruct((B, OUT_F), jnp.float32),
        grid_spec=pltpu.PrefetchScalarGridSpec(
            num_scalar_prefetch=0,
            grid=grid,
            in_specs=[
                pl.BlockSpec((block_b, IN_F), lambda i: (i, 0)),  # x tile (raw f32)
                full_spec((IN_F, H1)),   # w1
                full_spec((1, H1)),      # b1
                full_spec((H1, H2)),     # w2
                full_spec((1, H2)),      # b2
                full_spec((H2, OUT_F)),  # w3
                full_spec((1, OUT_F)),   # b3
            ],
            out_specs=pl.BlockSpec((block_b, OUT_F), lambda i: (i, 0)),
        ),
        compiler_params=pltpu.CompilerParams(
            dimension_semantics=("parallel",),
            vmem_limit_bytes=32 * 1024 * 1024,
        ),
    )(x, w1, b1, w2, b2, w3, b3)


def init_linear(key, fan_in, fan_out):
    """PyTorch nn.Linear default init (uniform +-1/sqrt(fan_in)).
    Weight stored transposed: (fan_in, fan_out); bias (1, fan_out)."""
    kw, kb = jax.random.split(key)
    bound = 1.0 / jnp.sqrt(fan_in)
    w = jax.random.uniform(kw, (fan_in, fan_out), jnp.float32, -bound, bound)
    b = jax.random.uniform(kb, (1, fan_out), jnp.float32, -bound, bound)
    return w, b


if __name__ == "__main__":
    key = jax.random.PRNGKey(0)
    k_x, k1, k2, k3 = jax.random.split(key, 4)

    batch = 50   # not a multiple of the tile -> exercises the partial last tile
    x = jax.random.normal(k_x, (batch, IN_F), jnp.float32)

    w1, b1 = init_linear(k1, IN_F, H1)
    w2, b2 = init_linear(k2, H1, H2)
    w3, b3 = init_linear(k3, H2, OUT_F)

    block_b = choose_block_b(batch, _num_tensorcores())
    out = net_forward(x, w1, b1, w2, b2, w3, b3, block_b=block_b)
    out = jax.block_until_ready(out)

    # (a) bf16-matched reference (same rounding points as the kernel).
    def r(v):
        return v.astype(jnp.bfloat16).astype(jnp.float32)

    h = jnp.maximum(r(x) @ r(w1) + b1, 0.0)
    h = jnp.maximum(r(h) @ r(w2) + b2, 0.0)
    ref_bf16 = jax.nn.sigmoid(r(h) @ r(w3) + b3)

    # (b) full-f32 reference (original PyTorch semantics).
    h32 = jnp.maximum(x @ w1 + b1, 0.0)
    h32 = jnp.maximum(h32 @ w2 + b2, 0.0)
    ref_f32 = jax.nn.sigmoid(h32 @ w3 + b3)

    assert out.shape == (batch, OUT_F)
    assert jnp.allclose(out, ref_bf16, atol=5e-3, rtol=0.0), float(
        jnp.max(jnp.abs(out - ref_bf16)))
    assert jnp.allclose(out, ref_f32, atol=2e-2, rtol=0.0), float(
        jnp.max(jnp.abs(out - ref_f32)))

    print("KERNEL_OK")
</pallas_src>

<mosaic_0001>
module attributes {stable_mosaic.version = 11 : i64} {
  func.func @mlp_kernel(%arg0: i32, %arg1: memref<56x104xf32, #tpu.memory_space<vmem>>, %arg2: memref<104x64xf32, #tpu.memory_space<vmem>>, %arg3: memref<1x64xf32, #tpu.memory_space<vmem>>, %arg4: memref<64x32xf32, #tpu.memory_space<vmem>>, %arg5: memref<1x32xf32, #tpu.memory_space<vmem>>, %arg6: memref<32x17xf32, #tpu.memory_space<vmem>>, %arg7: memref<1x17xf32, #tpu.memory_space<vmem>>, %arg8: memref<56x17xf32, #tpu.memory_space<vmem>>) attributes {dimension_semantics = [#tpu.dimension_semantics<parallel>], iteration_bounds = array<i64: 1>, scalar_prefetch = 0 : i64, scratch_operands = 0 : i64, tpu.core_type = #tpu.core_type<tc>, window_params = [{transform_indices = @transform_0, window_bounds = array<i64: 56, 104>}, {pipeline_mode = #tpu.pipeline_mode<synchronous>, transform_indices = @transform_1, window_bounds = array<i64: 104, 64>}, {pipeline_mode = #tpu.pipeline_mode<synchronous>, transform_indices = @transform_2, window_bounds = array<i64: 1, 64>}, {pipeline_mode = #tpu.pipeline_mode<synchronous>, transform_indices = @transform_3, window_bounds = array<i64: 64, 32>}, {pipeline_mode = #tpu.pipeline_mode<synchronous>, transform_indices = @transform_4, window_bounds = array<i64: 1, 32>}, {pipeline_mode = #tpu.pipeline_mode<synchronous>, transform_indices = @transform_5, window_bounds = array<i64: 32, 17>}, {pipeline_mode = #tpu.pipeline_mode<synchronous>, transform_indices = @transform_6, window_bounds = array<i64: 1, 17>}, {transform_indices = @transform_7, window_bounds = array<i64: 56, 17>}]} {
    %c0 = arith.constant 0 : index
    %c0_0 = arith.constant 0 : index
    %0 = vector.load %arg1[%c0, %c0_0] : memref<56x104xf32, #tpu.memory_space<vmem>>, vector<56x104xf32>
    %1 = arith.truncf %0 : vector<56x104xf32> to vector<56x104xbf16>
    %c0_1 = arith.constant 0 : index
    %c0_2 = arith.constant 0 : index
    %2 = vector.load %arg2[%c0_1, %c0_2] : memref<104x64xf32, #tpu.memory_space<vmem>>, vector<104x64xf32>
    %3 = arith.truncf %2 : vector<104x64xf32> to vector<104x64xbf16>
    %cst = arith.constant dense<0.000000e+00> : vector<56x64xf32>
    %4 = tpu.matmul %1, %3, %cst {dimension_numbers = #tpu.dot_dimension_numbers<[1], [0], [0], [1], [0, 0, 1, 1], [], []>} : vector<56x104xbf16>, vector<104x64xbf16>, vector<56x64xf32> -> vector<56x64xf32>
    %c0_3 = arith.constant 0 : index
    %c0_4 = arith.constant 0 : index
    %5 = vector.load %arg3[%c0_3, %c0_4] : memref<1x64xf32, #tpu.memory_space<vmem>>, vector<1x64xf32>
    %6 = vector.broadcast %5 : vector<1x64xf32> to vector<56x64xf32>
    %7 = arith.addf %4, %6 : vector<56x64xf32>
    %cst_5 = arith.constant 0.000000e+00 : f32
    %8 = vector.broadcast %cst_5 : f32 to vector<56x64xf32>
    %9 = arith.maximumf %7, %8 : vector<56x64xf32>
    %10 = arith.truncf %9 : vector<56x64xf32> to vector<56x64xbf16>
    %c0_6 = arith.constant 0 : index
    %c0_7 = arith.constant 0 : index
    %11 = vector.load %arg4[%c0_6, %c0_7] : memref<64x32xf32, #tpu.memory_space<vmem>>, vector<64x32xf32>
    %12 = arith.truncf %11 : vector<64x32xf32> to vector<64x32xbf16>
    %cst_8 = arith.constant dense<0.000000e+00> : vector<56x32xf32>
    %13 = tpu.matmul %10, %12, %cst_8 {dimension_numbers = #tpu.dot_dimension_numbers<[1], [0], [0], [1], [0, 0, 1, 1], [], []>} : vector<56x64xbf16>, vector<64x32xbf16>, vector<56x32xf32> -> vector<56x32xf32>
    %c0_9 = arith.constant 0 : index
    %c0_10 = arith.constant 0 : index
    %14 = vector.load %arg5[%c0_9, %c0_10] : memref<1x32xf32, #tpu.memory_space<vmem>>, vector<1x32xf32>
    %15 = vector.broadcast %14 : vector<1x32xf32> to vector<56x32xf32>
    %16 = arith.addf %13, %15 : vector<56x32xf32>
    %cst_11 = arith.constant 0.000000e+00 : f32
    %17 = vector.broadcast %cst_11 : f32 to vector<56x32xf32>
    %18 = arith.maximumf %16, %17 : vector<56x32xf32>
    %19 = arith.truncf %18 : vector<56x32xf32> to vector<56x32xbf16>
    %c0_12 = arith.constant 0 : index
    %c0_13 = arith.constant 0 : index
    %20 = vector.load %arg6[%c0_12, %c0_13] : memref<32x17xf32, #tpu.memory_space<vmem>>, vector<32x17xf32>
    %21 = arith.truncf %20 : vector<32x17xf32> to vector<32x17xbf16>
    %cst_14 = arith.constant dense<0.000000e+00> : vector<56x17xf32>
    %22 = tpu.matmul %19, %21, %cst_14 {dimension_numbers = #tpu.dot_dimension_numbers<[1], [0], [0], [1], [0, 0, 1, 1], [], []>} : vector<56x32xbf16>, vector<32x17xbf16>, vector<56x17xf32> -> vector<56x17xf32>
    %c0_15 = arith.constant 0 : index
    %c0_16 = arith.constant 0 : index
    %23 = vector.load %arg7[%c0_15, %c0_16] : memref<1x17xf32, #tpu.memory_space<vmem>>, vector<1x17xf32>
    %24 = vector.broadcast %23 : vector<1x17xf32> to vector<56x17xf32>
    %25 = arith.addf %22, %24 : vector<56x17xf32>
    %26 = arith.negf %25 : vector<56x17xf32>
    %27 = math.exp %26 : vector<56x17xf32>
    %cst_17 = arith.constant 1.000000e+00 : f32
    %28 = vector.broadcast %cst_17 : f32 to vector<56x17xf32>
    %29 = arith.addf %28, %27 : vector<56x17xf32>
    %30 = arith.divf %28, %29 : vector<56x17xf32>
    %c0_18 = arith.constant 0 : index
    %c0_19 = arith.constant 0 : index
    %31 = vector.load %arg8[%c0_18, %c0_19] : memref<56x17xf32, #tpu.memory_space<vmem>>, vector<56x17xf32>
    tpu.vector_store %arg8[%c0_18, %c0_19], %30 {strides = array<i32>} : memref<56x17xf32, #tpu.memory_space<vmem>>, vector<56x17xf32>,
    return
  }
  func.func @transform_0(%arg0: i32) -> (i32, i32) {
    %c0_i32 = arith.constant 0 : i32
    %c0_i32_0 = arith.constant 0 : i32
    return %arg0, %c0_i32 : i32, i32
  }
  func.func @transform_1(%arg0: i32) -> (i32, i32) {
    %c0_i32 = arith.constant 0 : i32
    %c0_i32_0 = arith.constant 0 : i32
    %c0_i32_1 = arith.constant 0 : i32
    return %c0_i32, %c0_i32_0 : i32, i32
  }
  func.func @transform_2(%arg0: i32) -> (i32, i32) {
    %c0_i32 = arith.constant 0 : i32
    %c0_i32_0 = arith.constant 0 : i32
    %c0_i32_1 = arith.constant 0 : i32
    return %c0_i32, %c0_i32_0 : i32, i32
  }
  func.func @transform_3(%arg0: i32) -> (i32, i32) {
    %c0_i32 = arith.constant 0 : i32
    %c0_i32_0 = arith.constant 0 : i32
    %c0_i32_1 = arith.constant 0 : i32
    return %c0_i32, %c0_i32_0 : i32, i32
  }
  func.func @transform_4(%arg0: i32) -> (i32, i32) {
    %c0_i32 = arith.constant 0 : i32
    %c0_i32_0 = arith.constant 0 : i32
    %c0_i32_1 = arith.constant 0 : i32
    return %c0_i32, %c0_i32_0 : i32, i32
  }
  func.func @transform_5(%arg0: i32) -> (i32, i32) {
    %c0_i32 = arith.constant 0 : i32
    %c0_i32_0 = arith.constant 0 : i32
    %c0_i32_1 = arith.constant 0 : i32
    return %c0_i32, %c0_i32_0 : i32, i32
  }
  func.func @transform_6(%arg0: i32) -> (i32, i32) {
    %c0_i32 = arith.constant 0 : i32
    %c0_i32_0 = arith.constant 0 : i32
    %c0_i32_1 = arith.constant 0 : i32
    return %c0_i32, %c0_i32_0 : i32, i32
  }
  func.func @transform_7(%arg0: i32) -> (i32, i32) {
    %c0_i32 = arith.constant 0 : i32
    %c0_i32_0 = arith.constant 0 : i32
    return %arg0, %c0_i32 : i32, i32
  }
}

</mosaic_0001>

<llo_original>
// kernel: net_forward.1
$region0: #{net_forward.1}
  #allocation0 [shape = 'u32[]', space=smem, size = 0x4, offset = 0x4, fixed_abs, tag = 'smem constant byte address 0x4 - core index']
  #allocation1 [shape = 'u32[72,128]{1,0:T(1,128)}', space=vmem, size = 0x9000, scoped, tag = 'internal scratch']
  %s0 = inlined_call_operand.vmem [shape: f32[50,104], index: 0, kind: input, shape index: {}]
  %s1 = inlined_call_operand.vmem [shape: f32[104,64], index: 1, kind: input, shape index: {}]
  %s2 = inlined_call_operand.vmem [shape: f32[1,64], index: 2, kind: input, shape index: {}]
  %s3 = inlined_call_operand.vmem [shape: f32[64,32], index: 3, kind: input, shape index: {}]
  %s4 = inlined_call_operand.vmem [shape: f32[1,32], index: 4, kind: input, shape index: {}]
  %s5 = inlined_call_operand.vmem [shape: f32[32,17], index: 5, kind: input, shape index: {}]
  %s6 = inlined_call_operand.vmem [shape: f32[1,17], index: 6, kind: input, shape index: {}]
  %s7 = inlined_call_operand.vmem [shape: f32[50,17], index: 7, kind: output, shape index: {}]
  %s8 = sld [smem:[#allocation0]]
  $region38: #{net_forward.1} parent=0
    _
  %s10 = ssub.s32 1, %s8
  %s11 = scalar_select 0, %s10, %s8
  // Predicated region
  $region2: #{net_forward.1} parent=0 // pred_check
    _
  $region3: #{net_forward.1} parent=0 // pred_check_branch
    %13 = sbr.rel (0) target = $region5
  $region4: #{net_forward.1} parent=0 // pred_region
    _
  $region5: #{net_forward.1} parent=0 // pred_fallthru
    _
  // Predicated region
  $region6: #{net_forward.1} parent=0 // pred_check
    _
  $region7: #{net_forward.1} parent=0 // pred_check_branch
    %15 = sbr.rel (0) target = $region9
  $region8: #{net_forward.1} parent=0 // pred_region
    _
  $region9: #{net_forward.1} parent=0 // pred_fallthru
    _
  // Predicated region
  $region10: #{net_forward.1} parent=0 // pred_check
    _
  $region11: #{net_forward.1} parent=0 // pred_check_branch
    %17 = sbr.rel (0) target = $region13
  $region12: #{net_forward.1} parent=0 // pred_region
    _
  $region13: #{net_forward.1} parent=0 // pred_fallthru
    _
  // Predicated region
  $region14: #{net_forward.1} parent=0 // pred_check
    _
  $region15: #{net_forward.1} parent=0 // pred_check_branch
    %19 = sbr.rel (0) target = $region17
  $region16: #{net_forward.1} parent=0 // pred_region
    _
  $region17: #{net_forward.1} parent=0 // pred_fallthru
    _
  // Predicated region
  $region18: #{net_forward.1} parent=0 // pred_check
    _
  $region19: #{net_forward.1} parent=0 // pred_check_branch
    %21 = sbr.rel (0) target = $region21
  $region20: #{net_forward.1} parent=0 // pred_region
    _
  $region21: #{net_forward.1} parent=0 // pred_fallthru
    _
  // Predicated region
  $region22: #{net_forward.1} parent=0 // pred_check
    _
  $region23: #{net_forward.1} parent=0 // pred_check_branch
    %23 = sbr.rel (0) target = $region25
  $region24: #{net_forward.1} parent=0 // pred_region
    _
  $region25: #{net_forward.1} parent=0 // pred_fallthru
    _
  // Predicated region
  $region26: #{net_forward.1} parent=0 // pred_check
    _
  $region27: #{net_forward.1} parent=0 // pred_check_branch
    %25 = sbr.rel (0) target = $region29
  $region28: #{net_forward.1} parent=0 // pred_region
    _
  $region29: #{net_forward.1} parent=0 // pred_fallthru
    _
  %v27 = vld [vmem:[%s0] sm:$0xff]
  %v28 = vld [vmem:[%s0 + $0x8] sm:$0xff]
  %v29 = vld [vmem:[%s0 + $0x10] sm:$0xff]
  %v30 = vld [vmem:[%s0 + $0x18] sm:$0xff]
  %v31 = vld [vmem:[%s0 + $0x20] sm:$0xff]
  %v32 = vld [vmem:[%s0 + $0x28] sm:$0xff]
  %v33 = vld [vmem:[%s0 + $0x30] sm:$0xff]
  %v34 = vpack.c.bf16 %v28, %v27
  %v35 = vpack.c.bf16 %v30, %v29
  %v36 = vpack.c.bf16 %v32, %v31
  %v37 = vpack.c.bf16 %v33, %v33
  %v38 = vld [vmem:[%s1] sm:$0xff]
  %v39 = vld [vmem:[%s1 + $0x8] sm:$0xff]
  %v40 = vld [vmem:[%s1 + $0x10] sm:$0xff]
  %v41 = vld [vmem:[%s1 + $0x18] sm:$0xff]
  %v42 = vld [vmem:[%s1 + $0x20] sm:$0xff]
  %v43 = vld [vmem:[%s1 + $0x28] sm:$0xff]
  %v44 = vld [vmem:[%s1 + $0x30] sm:$0xff]
  %v45 = vld [vmem:[%s1 + $0x38] sm:$0xff]
  %v46 = vld [vmem:[%s1 + $0x40] sm:$0xff]
  %v47 = vld [vmem:[%s1 + $0x48] sm:$0xff]
  %v48 = vld [vmem:[%s1 + $0x50] sm:$0xff]
  %v49 = vld [vmem:[%s1 + $0x58] sm:$0xff]
  %v50 = vld [vmem:[%s1 + $0x60] sm:$0xff]
  %v51 = vpack.c.bf16 %v39, %v38
  %v52 = vpack.c.bf16 %v41, %v40
  %v53 = vpack.c.bf16 %v43, %v42
  %v54 = vpack.c.bf16 %v45, %v44
  %v55 = vpack.c.bf16 %v47, %v46
  %v56 = vpack.c.bf16 %v49, %v48
  %v57 = vpack.c.bf16 %v50, %v50
  %v58 = vld [vmem:[%s2] sm:$0x1]
  %v60 = vperm.slane %v58, 0
  %vm62 = vcmask 850944
  %v64 = vsel %vm62, %v34, 0
  %v67 = vsel %vm62, %v35, 0
  %v70 = vsel %vm62, %v36, 0
  %v73 = vsel %vm62, %v37, 0
  %vm75 = vcmask 1043456
  %v77 = vsel %vm75, %v57, 0
  %79 = vmatpush.bf16.msra.mxu0 0
  %80 = vmatpush.bf16.msra.mxu0 %v77
  %81 = vmatpush.bf16.msra.mxu0 %v56
  %82 = vmatpush.bf16.msra.mxu0 %v55
  %83 = vmatpush.bf16.msra.mxu0 %v54
  %84 = vmatpush.bf16.msra.mxu0 %v53
  %85 = vmatpush.bf16.msra.mxu0 %v52
  %86 = vmatpush.bf16.msra.mxu0 %v51
  %87 = vmatmul.bf16.gmra.mxu0 %v64
  %v88 = vpop.f32.mrf.mxu0
  %v89 = vadd.f32 %v60, %v88
  %v90 = vpop.f32.mrf.mxu0
  %v91 = vadd.f32 %v60, %v90
  %92 = vmatmul.bf16.gmra.mxu0 %v67
  %v93 = vpop.f32.mrf.mxu0
  %v94 = vadd.f32 %v60, %v93
  %v95 = vpop.f32.mrf.mxu0
  %v96 = vadd.f32 %v60, %v95
  %97 = vmatmul.bf16.gmra.mxu0 %v70
  %v98 = vpop.f32.mrf.mxu0
  %v99 = vadd.f32 %v60, %v98
  %v100 = vpop.f32.mrf.mxu0
  %v101 = vadd.f32 %v60, %v100
  %102 = vmatmul.bf16.gmra.mxu0 %v73
  %v103 = vpop.f32.mrf.mxu0
  %v104 = vadd.f32 %v60, %v103
  %v105 = vpop.f32.mrf.mxu0
  %106 = vdwg.mxu0
  %v107 = vmax.f32 %v89, 0.0
  %v108 = vmax.f32 %v91, 0.0
  %v109 = vmax.f32 %v94, 0.0
  %v110 = vmax.f32 %v96, 0.0
  %v111 = vmax.f32 %v99, 0.0
  %v112 = vmax.f32 %v101, 0.0
  %v113 = vmax.f32 %v104, 0.0
  %v114 = vpack.c.bf16 %v108, %v107
  %v115 = vpack.c.bf16 %v110, %v109
  %v116 = vpack.c.bf16 %v112, %v111
  %v117 = vpack.c.bf16 %v113, %v113
  %v118 = vld [vmem:[%s3] sm:$0xff]
  %v119 = vld [vmem:[%s3 + $0x8] sm:$0xff]
  %v120 = vld [vmem:[%s3 + $0x10] sm:$0xff]
  %v121 = vld [vmem:[%s3 + $0x18] sm:$0xff]
  %v122 = vld [vmem:[%s3 + $0x20] sm:$0xff]
  %v123 = vld [vmem:[%s3 + $0x28] sm:$0xff]
  %v124 = vld [vmem:[%s3 + $0x30] sm:$0xff]
  %v125 = vld [vmem:[%s3 + $0x38] sm:$0xff]
  %v126 = vpack.c.bf16 %v119, %v118
  %v127 = vpack.c.bf16 %v121, %v120
  %v128 = vpack.c.bf16 %v123, %v122
  %v129 = vpack.c.bf16 %v125, %v124
  %v130 = vld [vmem:[%s4] sm:$0x1]
  %v132 = vperm.slane %v130, 0
  %vm134 = vcmask 523264
  %v136 = vsel %vm134, %v114, 0
  %v139 = vsel %vm134, %v115, 0
  %v142 = vsel %vm134, %v116, 0
  %v145 = vsel %vm134, %v117, 0
  %147 = vmatpush.bf16.msra.mxu0 0
  %148 = vmatpush.bf16.msra.mxu0 0
  %149 = vmatpush.bf16.msra.mxu0 0
  %150 = vmatpush.bf16.msra.mxu0 0
  %151 = vmatpush.bf16.msra.mxu0 %v129
  %152 = vmatpush.bf16.msra.mxu0 %v128
  %153 = vmatpush.bf16.msra.mxu0 %v127
  %154 = vmatpush.bf16.msra.mxu0 %v126
  %155 = vmatmul.bf16.gmra.mxu0 %v136
  %v156 = vpop.f32.mrf.mxu0
  %v157 = vadd.f32 %v132, %v156
  %v158 = vpop.f32.mrf.mxu0
  %v159 = vadd.f32 %v132, %v158
  %160 = vmatmul.bf16.gmra.mxu0 %v139
  %v161 = vpop.f32.mrf.mxu0
  %v162 = vadd.f32 %v132, %v161
  %v163 = vpop.f32.mrf.mxu0
  %v164 = vadd.f32 %v132, %v163
  %165 = vmatmul.bf16.gmra.mxu0 %v142
  %v166 = vpop.f32.mrf.mxu0
  %v167 = vadd.f32 %v132, %v166
  %v168 = vpop.f32.mrf.mxu0
  %v169 = vadd.f32 %v132, %v168
  %170 = vmatmul.bf16.gmra.mxu0 %v145
  %v171 = vpop.f32.mrf.mxu0
  %v172 = vadd.f32 %v132, %v171
  %v173 = vpop.f32.mrf.mxu0
  %174 = vdwg.mxu0
  %v175 = vmax.f32 %v157, 0.0
  %v176 = vmax.f32 %v159, 0.0
  %v177 = vmax.f32 %v162, 0.0
  %v178 = vmax.f32 %v164, 0.0
  %v179 = vmax.f32 %v167, 0.0
  %v180 = vmax.f32 %v169, 0.0
  %v181 = vmax.f32 %v172, 0.0
  %v182 = vpack.c.bf16 %v176, %v175
  %v183 = vpack.c.bf16 %v178, %v177
  %v184 = vpack.c.bf16 %v180, %v179
  %v185 = vpack.c.bf16 %v181, %v181
  %v186 = vld [vmem:[%s5] sm:$0xff]
  %v187 = vld [vmem:[%s5 + $0x8] sm:$0xff]
  %v188 = vld [vmem:[%s5 + $0x10] sm:$0xff]
  %v189 = vld [vmem:[%s5 + $0x18] sm:$0xff]
  %v190 = vpack.c.bf16 %v187, %v186
  %v191 = vpack.c.bf16 %v189, %v188
  %v192 = vld [vmem:[%s6] sm:$0x1]
  %v194 = vperm.slane %v192, 0
  %vm196 = vcmask 261120
  %v198 = vsel %vm196, %v182, 0
  %v201 = vsel %vm196, %v183, 0
  %v204 = vsel %vm196, %v184, 0
  %v207 = vsel %vm196, %v185, 0
  %209 = vmatpush.bf16.msra.mxu0 0
  %210 = vmatpush.bf16.msra.mxu0 0
  %211 = vmatpush.bf16.msra.mxu0 0
  %212 = vmatpush.bf16.msra.mxu0 0
  %213 = vmatpush.bf16.msra.mxu0 0
  %214 = vmatpush.bf16.msra.mxu0 0
  %215 = vmatpush.bf16.msra.mxu0 %v191
  %216 = vmatpush.bf16.msra.mxu0 %v190
  %217 = vmatmul.bf16.gmra.mxu0 %v198
  %v218 = vpop.f32.mrf.mxu0
  %v219 = vadd.f32 %v194, %v218
  %v220 = vpop.f32.mrf.mxu0
  %v221 = vadd.f32 %v194, %v220
  %222 = vmatmul.bf16.gmra.mxu0 %v201
  %v223 = vpop.f32.mrf.mxu0
  %v224 = vadd.f32 %v194, %v223
  %v225 = vpop.f32.mrf.mxu0
  %v226 = vadd.f32 %v194, %v225
  %227 = vmatmul.bf16.gmra.mxu0 %v204
  %v228 = vpop.f32.mrf.mxu0
  %v229 = vadd.f32 %v194, %v228
  %v230 = vpop.f32.mrf.mxu0
  %v231 = vadd.f32 %v194, %v230
  %232 = vmatmul.bf16.gmra.mxu0 %v207
  %v233 = vpop.f32.mrf.mxu0
  %v234 = vadd.f32 %v194, %v233
  %v235 = vpop.f32.mrf.mxu0
  %236 = vdwg.mxu0
  %v237 = vxor.u32 %v219, 2147483648
  %v238 = vxor.u32 %v221, 2147483648
  %v239 = vxor.u32 %v224, 2147483648
  %v240 = vxor.u32 %v226, 2147483648
  %v241 = vxor.u32 %v229, 2147483648
  %v242 = vxor.u32 %v231, 2147483648
  %v243 = vxor.u32 %v234, 2147483648
  %v244 = vmul.f32 %v237, 1.442695
  %v245 = vpow.pop %v244
  %v246 = vmul.f32 %v238, 1.442695
  %v247 = vpow.pop %v246
  %v248 = vmul.f32 %v239, 1.442695
  %v249 = vpow.pop %v248
  %v250 = vmul.f32 %v240, 1.442695
  %v251 = vpow.pop %v250
  %v252 = vmul.f32 %v241, 1.442695
  %v253 = vpow.pop %v252
  %v254 = vmul.f32 %v242, 1.442695
  %v255 = vpow.pop %v254
  %v256 = vmul.f32 %v243, 1.442695
  %v257 = vpow.pop %v256
  %v258 = vadd.f32 %v245, 1.0
  %v259 = vadd.f32 %v247, 1.0
  %v260 = vadd.f32 %v249, 1.0
  %v261 = vadd.f32 %v251, 1.0
  %v262 = vadd.f32 %v253, 1.0
  %v263 = vadd.f32 %v255, 1.0
  %v264 = vadd.f32 %v257, 1.0
  %v265 = vrcp.pop %v258
  %v266 = vmul.f32 %v258, %v265
  %v267 = vsub.f32 1.0, %v266
  %v268 = vmul.f32 %v265, %v267
  %v269 = vadd.f32 %v265, %v268
  %vm270 = vweird.f32 %v258
  %vm271 = vweird.f32 %v265
  %vm272 = vmor %vm270, %vm271
  %v273 = vsel %vm272, %v265, %v269
  %v274 = vand.u32 2147483647, %v258
  %vm275 = vcmp.eq.f32.partialorder %v274, 8.507059e+37
  %v276 = vand.u32 %v258, 2147483648
  %v277 = vor.u32 1.1754944e-38, %v276
  %v278 = vsel %vm275, %v277, %v273
  %v279 = vmul.f32 1.0, %v278
  %v280 = vrcp.pop %v259
  %v281 = vmul.f32 %v259, %v280
  %v282 = vsub.f32 1.0, %v281
  %v283 = vmul.f32 %v280, %v282
  %v284 = vadd.f32 %v280, %v283
  %vm285 = vweird.f32 %v259
  %vm286 = vweird.f32 %v280
  %vm287 = vmor %vm285, %vm286
  %v288 = vsel %vm287, %v280, %v284
  %v289 = vand.u32 2147483647, %v259
  %vm290 = vcmp.eq.f32.partialorder %v289, 8.507059e+37
  %v291 = vand.u32 %v259, 2147483648
  %v292 = vor.u32 1.1754944e-38, %v291
  %v293 = vsel %vm290, %v292, %v288
  %v294 = vmul.f32 1.0, %v293
  %v295 = vrcp.pop %v260
  %v296 = vmul.f32 %v260, %v295
  %v297 = vsub.f32 1.0, %v296
  %v298 = vmul.f32 %v295, %v297
  %v299 = vadd.f32 %v295, %v298
  %vm300 = vweird.f32 %v260
  %vm301 = vweird.f32 %v295
  %vm302 = vmor %vm300, %vm301
  %v303 = vsel %vm302, %v295, %v299
  %v304 = vand.u32 2147483647, %v260
  %vm305 = vcmp.eq.f32.partialorder %v304, 8.507059e+37
  %v306 = vand.u32 %v260, 2147483648
  %v307 = vor.u32 1.1754944e-38, %v306
  %v308 = vsel %vm305, %v307, %v303
  %v309 = vmul.f32 1.0, %v308
  %v310 = vrcp.pop %v261
  %v311 = vmul.f32 %v261, %v310
  %v312 = vsub.f32 1.0, %v311
  %v313 = vmul.f32 %v310, %v312
  %v314 = vadd.f32 %v310, %v313
  %vm315 = vweird.f32 %v261
  %vm316 = vweird.f32 %v310
  %vm317 = vmor %vm315, %vm316
  %v318 = vsel %vm317, %v310, %v314
  %v319 = vand.u32 2147483647, %v261
  %vm320 = vcmp.eq.f32.partialorder %v319, 8.507059e+37
  %v321 = vand.u32 %v261, 2147483648
  %v322 = vor.u32 1.1754944e-38, %v321
  %v323 = vsel %vm320, %v322, %v318
  %v324 = vmul.f32 1.0, %v323
  %v325 = vrcp.pop %v262
  %v326 = vmul.f32 %v262, %v325
  %v327 = vsub.f32 1.0, %v326
  %v328 = vmul.f32 %v325, %v327
  %v329 = vadd.f32 %v325, %v328
  %vm330 = vweird.f32 %v262
  %vm331 = vweird.f32 %v325
  %vm332 = vmor %vm330, %vm331
  %v333 = vsel %vm332, %v325, %v329
  %v334 = vand.u32 2147483647, %v262
  %vm335 = vcmp.eq.f32.partialorder %v334, 8.507059e+37
  %v336 = vand.u32 %v262, 2147483648
  %v337 = vor.u32 1.1754944e-38, %v336
  %v338 = vsel %vm335, %v337, %v333
  %v339 = vmul.f32 1.0, %v338
  %v340 = vrcp.pop %v263
  %v341 = vmul.f32 %v263, %v340
  %v342 = vsub.f32 1.0, %v341
  %v343 = vmul.f32 %v340, %v342
  %v344 = vadd.f32 %v340, %v343
  %vm345 = vweird.f32 %v263
  %vm346 = vweird.f32 %v340
  %vm347 = vmor %vm345, %vm346
  %v348 = vsel %vm347, %v340, %v344
  %v349 = vand.u32 2147483647, %v263
  %vm350 = vcmp.eq.f32.partialorder %v349, 8.507059e+37
  %v351 = vand.u32 %v263, 2147483648
  %v352 = vor.u32 1.1754944e-38, %v351
  %v353 = vsel %vm350, %v352, %v348
  %v354 = vmul.f32 1.0, %v353
  %v355 = vrcp.pop %v264
  %v356 = vmul.f32 %v264, %v355
  %v357 = vsub.f32 1.0, %v356
  %v358 = vmul.f32 %v355, %v357
  %v359 = vadd.f32 %v355, %v358
  %vm360 = vweird.f32 %v264
  %vm361 = vweird.f32 %v355
  %vm362 = vmor %vm360, %vm361
  %v363 = vsel %vm362, %v355, %v359
  %v364 = vand.u32 2147483647, %v264
  %vm365 = vcmp.eq.f32.partialorder %v364, 8.507059e+37
  %v366 = vand.u32 %v264, 2147483648
  %v367 = vor.u32 1.1754944e-38, %v366
  %v368 = vsel %vm365, %v367, %v363
  %v369 = vmul.f32 1.0, %v368
  %vm370 = vcmask 138240
  %371 = vst.msk [vmem:[%s7] sm:$0xff] %vm370, %v279
  %372 = vst.msk [vmem:[%s7 + $0x8] sm:$0xff] %vm370, %v294
  %373 = vst.msk [vmem:[%s7 + $0x10] sm:$0xff] %vm370, %v309
  %374 = vst.msk [vmem:[%s7 + $0x18] sm:$0xff] %vm370, %v324
  %375 = vst.msk [vmem:[%s7 + $0x20] sm:$0xff] %vm370, %v339
  %376 = vst.msk [vmem:[%s7 + $0x28] sm:$0xff] %vm370, %v354
  %377 = vst.msk [vmem:[%s7 + $0x30] sm:$0xff] %vm370, %v369
  // Predicated region
  $region30: #{net_forward.1} parent=0 // pred_check
    _
  $region31: #{net_forward.1} parent=0 // pred_check_branch
    %379 = sbr.rel (0) target = $region33
  $region32: #{net_forward.1} parent=0 // pred_region
    _
  $region33: #{net_forward.1} parent=0 // pred_fallthru
    _
  // Predicated region
  $region34: #{net_forward.1} parent=0 // pred_check
    _
  $region35: #{net_forward.1} parent=0 // pred_check_branch
    %381 = sbr.rel (0) target = $region37
  $region36: #{net_forward.1} parent=0 // pred_region
    _
  $region37: #{net_forward.1} parent=0 // pred_fallthru
    _

</llo_original>
